<compile_context>
chip_gen: v7x
topology: tpu7x:2x2x1
jax: 0.10.0
libtpu: 0.0.40
codegen_flags: <defaults>
</compile_context>

<pallas_src>
import functools

import jax
import jax.numpy as jnp
from jax.experimental import pallas as pl
from jax.experimental.pallas import tpu as pltpu


# ----------------------------------------------------------------------------
# One-time pltpu.roll convention probe (cached; a single tiny kernel launch at
# first use).  Assumes the rotation convention is uniform across local devices.
# The end-to-end reference check in __main__ would catch a wrong convention.
# ----------------------------------------------------------------------------
def _roll_probe_kernel(x_ref, o_ref):
    o_ref[...] = pltpu.roll(x_ref[...], shift=1, axis=1)


@functools.lru_cache(maxsize=None)
def _roll_matches_numpy() -> bool:
    n = 128
    x = jax.lax.broadcasted_iota(jnp.float32, (8, n), 1)
    y = pl.pallas_call(
        _roll_probe_kernel,
        out_shape=jax.ShapeDtypeStruct((8, n), jnp.float32),
        in_specs=[pl.BlockSpec(memory_space=pltpu.MemorySpace.VMEM)],
        out_specs=pl.BlockSpec(memory_space=pltpu.MemorySpace.VMEM),
    )(x)
    # np.roll(iota, 1)[0] == n-1 ; the opposite convention gives 1.
    return bool(y[0, 0] == float(n - 1))


# ----------------------------------------------------------------------------
# Fused DynamGSConv kernel: one grid step == B_tile images, channels-first,
# images concatenated on the (flattened, lane-dense) spatial axis.
# ----------------------------------------------------------------------------
def _dynam_gsconv_kernel(
    x_ref,        # (C1, Bt*HW)     input tile, lane index g = b*HW + (h*W + w)
    wbig_ref,     # (RW, WCOLS)     packed: w_cv1*s1 | fc_w1 | fc_w2 | fc_w3 | w_mix*s2 | eca
    bias_ref,     # (RB, 1)         packed: b1 | fc_b1 | fc_b2 | fc_b3 | b2
    wpad_ref,     # (KS*KS*C_, K)   depthwise taps, tap-major
    segt_ref,     # (Bt*HW, Bt)     per-image mean matrix (entries 1/HW)
    o_ref,        # (C2, Bt*HW)
    *, H, W, HW, Bt, KS, C1, C_, CR, K, C2, woffs, boffs, roll_to_np,
):
    f32 = jnp.float32
    BHW = Bt * HW
    p = KS // 2

    # ---- unpack constants (static, 8-row-aligned ref slices) ----------------
    wcv1 = wbig_ref[woffs[0]:woffs[0] + C_, 0:C1]
    w1 = wbig_ref[woffs[1]:woffs[1] + CR, 0:C_]
    w2 = wbig_ref[woffs[2]:woffs[2] + CR, 0:CR]
    w3 = wbig_ref[woffs[3]:woffs[3] + K, 0:CR]
    wmix = wbig_ref[woffs[4]:woffs[4] + C2, 0:2 * C_]
    eca = wbig_ref[woffs[5]:woffs[5] + C2, 0:C2]
    b1 = bias_ref[boffs[0]:boffs[0] + C_, :]
    bf1 = bias_ref[boffs[1]:boffs[1] + CR, :]
    bf2 = bias_ref[boffs[2]:boffs[2] + CR, :]
    bf3 = bias_ref[boffs[3]:boffs[3] + K, :]
    b2 = bias_ref[boffs[4]:boffs[4] + C2, :]

    # ---- cv1: 1x1 conv (BN scale pre-folded) + bias + SiLU ------------------
    x1 = jnp.dot(wcv1, x_ref[...], preferred_element_type=f32) + b1
    x1 = x1 * jax.nn.sigmoid(x1)                                  # (C_, BHW)

    # ---- DynamicConv gating: per-image GAP -> MLP -> softmax over K ---------
    pooled = jnp.dot(x1, segt_ref[...], preferred_element_type=f32)  # (C_, Bt)
    h = jnp.maximum(jnp.dot(w1, pooled, preferred_element_type=f32) + bf1, 0.0)
    h = jnp.maximum(jnp.dot(w2, h, preferred_element_type=f32) + bf2, 0.0)
    logits = jnp.dot(w3, h, preferred_element_type=f32) + bf3        # (K, Bt)
    logits = logits - jnp.max(logits, axis=0, keepdims=True)
    e = jnp.exp(logits)
    alpha = e / jnp.sum(e, axis=0, keepdims=True)                    # (K, Bt)

    # Per-image mixture weights broadcast over each image's lane segment.
    gidx = jax.lax.broadcasted_iota(jnp.int32, (Bt, BHW), 1)
    bidx = jax.lax.broadcasted_iota(jnp.int32, (Bt, BHW), 0)
    seg = (gidx // HW == bidx).astype(f32)                           # (Bt, BHW)
    alpha_b = jnp.dot(alpha, seg, preferred_element_type=f32)        # (K, BHW)

    # ---- K-mixture depthwise KSxKS 'same' conv on the flattened lane axis ---
    lane = jax.lax.broadcasted_iota(jnp.int32, (1, BHW), 1)
    idx = lane % HW
    row_id = idx // W
    col_id = idx % W
    rmask = {d: (row_id >= -d) if d < 0 else (row_id < H - d)
             for d in range(-p, p + 1) if d != 0}
    cmask = {d: (col_id >= -d) if d < 0 else (col_id < W - d)
             for d in range(-p, p + 1) if d != 0}

    def tap_w(t):
        # Per-image effective tap weight, already lane-broadcast (tiny MXU op).
        return jnp.dot(wpad_ref[t * C_:(t + 1) * C_, :], alpha_b,
                       preferred_element_type=f32)                   # (C_, BHW)

    acc = x1 * tap_w(p * KS + p)                  # center tap: no roll, no mask
    for dy in range(KS):
        di = dy - p
        for dx in range(KS):
            dj = dx - p
            if di == 0 and dj == 0:
                continue
            s = di * W + dj
            amt = (-s) % BHW if roll_to_np else s % BHW
            shifted = pltpu.roll(x1, shift=amt, axis=1)
            if di == 0:
                m = cmask[dj]
            elif dj == 0:
                m = rmask[di]
            else:
                m = rmask[di] & cmask[dj]
            shifted = jnp.where(m, shifted, 0.0)
            acc = acc + shifted * tap_w(dy * KS + dx)
    # acc == x2 (DynamicConv output)

    # ---- channel_mix: one matmul on the sublane concat (BN scale folded) ----
    xc = jnp.concatenate([x1, acc], axis=0)                          # (2C_, BHW)
    y = jnp.dot(wmix, xc, preferred_element_type=f32) + b2           # (C2, BHW)

    # ---- ECA (per-image GAP -> band matmul -> sigmoid -> scale) + SiLU ------
    pooled2 = jnp.dot(y, segt_ref[...], preferred_element_type=f32)  # (C2, Bt)
    att = jax.nn.sigmoid(jnp.dot(eca, pooled2, preferred_element_type=f32))
    z = y * jnp.dot(att, seg, preferred_element_type=f32)
    o_ref[...] = z * jax.nn.sigmoid(z)


def _round8(n):
    return ((n + 7) // 8) * 8


def _pick_batch_tile(batch, hw, c1, c_, c2, k, vmem_budget=8 << 20):
    """Largest divisor of `batch` that keeps >=2 grid steps when possible,
    respects a per-step VMEM budget, and keeps the lane tile 128-aligned."""
    per_img = hw * 4 * (c1 + c2 + 4 * c_ + k + 192)
    cap = max(1, vmem_budget // max(per_img, 1))
    cands = [d for d in range(1, batch + 1)
             if batch % d == 0 and ((d * hw) % 128 == 0 or d == batch)]
    good = [d for d in cands if d <= cap] or cands
    pref = [d for d in good if batch // d >= 2] or good
    return max(pref)


def dynam_gsconv_forward(x_nchw, params, *, kernel_sizes, eca_k, eps=1e-5):
    B, C1, H, W = x_nchw.shape
    HW = H * W
    K = len(kernel_sizes)
    KS = max(kernel_sizes)
    KK = KS * KS
    c_ = params["w_cv1"].shape[0]
    c2 = params["w_mix"].shape[0]
    cr = params["fc_w1"].shape[0]
    f32 = jnp.float32
    # Conservative sanity check for the roll+mask 'same'-conv scheme.
    assert KS // 2 < min(H, W), "kernel half-width must be < spatial dims"

    # ---- fold eval-mode BN into the conv weights (host side, once) ----------
    s1 = params["gamma1"] / jnp.sqrt(params["var1"] + eps)
    b1 = params["beta1"] - params["mean1"] * s1
    s2 = params["gamma2"] / jnp.sqrt(params["var2"] + eps)
    b2 = params["beta2"] - params["mean2"] * s2
    w_cv1_s = params["w_cv1"].astype(f32) * s1[:, None]
    w_mix_s = params["w_mix"].astype(f32) * s2[:, None]

    # ---- depthwise kernels padded to KSxKS, flattened tap-major -------------
    wpad = []
    for k_i, wk in zip(kernel_sizes, params["w_dw"]):
        off = (KS - k_i) // 2
        wpad.append(jnp.zeros((c_, KS, KS), f32)
                    .at[:, off:off + k_i, off:off + k_i].set(wk.astype(f32)))
    wpad = jnp.stack(wpad, axis=0)                                  # (K,c_,KS,KS)
    wpad_flat = wpad.reshape(K, c_, KK).transpose(2, 1, 0).reshape(KK * c_, K)

    # ---- ECA band matrix -----------------------------------------------------
    pad = (eca_k - 1) // 2
    eca_band = jnp.zeros((c2, c2), f32)
    for t in range(eca_k):
        eca_band = eca_band + params["eca_w"][t] * jnp.eye(c2, c2, k=t - pad,
                                                           dtype=f32)

    # ---- batch tile / grid ---------------------------------------------------
    Bt = _pick_batch_tile(B, HW, C1, c_, c2, K)
    BHW = Bt * HW
    nsteps = B // Bt

    # ---- packed constant slabs (operand consolidation) -----------------------
    wcols = max(C1, c_, cr, 2 * c_, c2)
    wsecs = [w_cv1_s, params["fc_w1"].astype(f32), params["fc_w2"].astype(f32),
             params["fc_w3"].astype(f32), w_mix_s, eca_band]
    woffs, rows = [], 0
    for m in wsecs:
        woffs.append(rows)
        rows += _round8(m.shape[0])
    wbig = jnp.zeros((rows, wcols), f32)
    for o, m in zip(woffs, wsecs):
        wbig = wbig.at[o:o + m.shape[0], :m.shape[1]].set(m)

    bsecs = [b1, params["fc_b1"], params["fc_b2"], params["fc_b3"], b2]
    boffs, brows = [], 0
    for v in bsecs:
        boffs.append(brows)
        brows += _round8(v.shape[0])
    bias_col = jnp.zeros((brows, 1), f32)
    for o, v in zip(boffs, bsecs):
        bias_col = bias_col.at[o:o + v.shape[0], 0].set(v.astype(f32))

    # Per-image mean matrix: segt[b*HW + j, b] = 1/HW.
    segt = jnp.repeat(jnp.eye(Bt, dtype=f32), HW, axis=0) / float(HW)

    # ---- channels-first layout, images concatenated on the lane axis --------
    x_cf = x_nchw.astype(f32).transpose(1, 0, 2, 3).reshape(C1, B * HW)

    kern = functools.partial(
        _dynam_gsconv_kernel, H=H, W=W, HW=HW, Bt=Bt, KS=KS,
        C1=C1, C_=c_, CR=cr, K=K, C2=c2,
        woffs=tuple(woffs), boffs=tuple(boffs),
        roll_to_np=_roll_matches_numpy())

    out_cf = pl.pallas_call(
        kern,
        out_shape=jax.ShapeDtypeStruct((c2, B * HW), f32),
        grid=(nsteps,),
        in_specs=[
            pl.BlockSpec((C1, BHW), lambda t: (0, t)),        # x tile
            pl.BlockSpec((rows, wcols), lambda t: (0, 0)),    # packed weights
            pl.BlockSpec((brows, 1), lambda t: (0, 0)),       # packed biases
            pl.BlockSpec((KK * c_, K), lambda t: (0, 0)),     # depthwise taps
            pl.BlockSpec((BHW, Bt), lambda t: (0, 0)),        # segment means
        ],
        out_specs=pl.BlockSpec((c2, BHW), lambda t: (0, t)),
        compiler_params=pltpu.CompilerParams(
            dimension_semantics=("parallel",),
            vmem_limit_bytes=32 * 1024 * 1024),
    )(x_cf, wbig, bias_col, wpad_flat, segt)

    return out_cf.reshape(c2, B, H, W).transpose(1, 0, 2, 3)


# ----------------------------------------------------------------------------
# Pure-JAX reference (mirrors the PyTorch module, eval-mode BN)
# ----------------------------------------------------------------------------
def reference_forward(x, params, *, kernel_sizes, eca_k, eps=1e-5):
    P = jax.lax.Precision.HIGHEST
    c_ = params["w_cv1"].shape[0]

    s1 = params["gamma1"] / jnp.sqrt(params["var1"] + eps)
    b1 = params["beta1"] - params["mean1"] * s1
    x1 = jnp.einsum("oc,bchw->bohw", params["w_cv1"], x, precision=P)
    x1 = x1 * s1[None, :, None, None] + b1[None, :, None, None]
    x1 = x1 * jax.nn.sigmoid(x1)

    pooled = jnp.mean(x1, axis=(2, 3))                            # (B, c_)
    h = jax.nn.relu(jnp.matmul(pooled, params["fc_w1"].T, precision=P)
                    + params["fc_b1"])
    h = jax.nn.relu(jnp.matmul(h, params["fc_w2"].T, precision=P)
                    + params["fc_b2"])
    logits = jnp.matmul(h, params["fc_w3"].T, precision=P) + params["fc_b3"]
    alpha = jax.nn.softmax(logits, axis=1)                        # (B, K)

    outs = []
    for k_i, wk in zip(kernel_sizes, params["w_dw"]):
        pad = k_i // 2
        outs.append(jax.lax.conv_general_dilated(
            x1, wk[:, None, :, :], window_strides=(1, 1),
            padding=((pad, pad), (pad, pad)),
            dimension_numbers=("NCHW", "OIHW", "NCHW"),
            feature_group_count=c_, precision=P))
    stacked = jnp.stack(outs, axis=1)                             # (B,K,c_,H,W)
    x2 = jnp.sum(stacked * alpha[:, :, None, None, None], axis=1)

    xc = jnp.concatenate([x1, x2], axis=1)
    y = jnp.einsum("oc,bchw->bohw", params["w_mix"], xc, precision=P)
    s2 = params["gamma2"] / jnp.sqrt(params["var2"] + eps)
    b2 = params["beta2"] - params["mean2"] * s2
    y = y * s2[None, :, None, None] + b2[None, :, None, None]

    c2 = y.shape[1]
    pad = (eca_k - 1) // 2
    gp = jnp.mean(y, axis=(2, 3))                                 # (B, c2)
    gpp = jnp.pad(gp, ((0, 0), (pad, pad)))
    att = jnp.zeros_like(gp)
    for t in range(eca_k):
        att = att + params["eca_w"][t] * gpp[:, t:t + c2]
    att = jax.nn.sigmoid(att)
    z = y * att[:, :, None, None]
    return z * jax.nn.sigmoid(z)


# ----------------------------------------------------------------------------
# Parameter construction (deterministic, synthetic; PyTorch weight layouts)
# ----------------------------------------------------------------------------
def init_params(key, c1, c2, kernel_sizes, reduction, eca_k):
    c_ = c2 // 2
    K = len(kernel_sizes)
    cr = max(c_ // reduction, 1)
    keys = jax.random.split(key, 16)

    def nrm(k, shape, s=0.25):
        return (s * jax.random.normal(k, shape)).astype(jnp.float32)

    p = {}
    p["w_cv1"] = nrm(keys[0], (c_, c1))                 # conv2d (out, in)
    p["gamma1"] = 1.0 + 0.1 * jnp.arange(c_, dtype=jnp.float32) / c_
    p["beta1"] = 0.05 * jnp.ones((c_,), jnp.float32)
    p["mean1"] = 0.01 * jnp.arange(c_, dtype=jnp.float32)
    p["var1"] = 1.0 + 0.2 * jnp.arange(c_, dtype=jnp.float32) / c_

    p["w_dw"] = tuple(nrm(keys[1 + i], (c_, k, k))      # depthwise (C,k,k)
                      for i, k in enumerate(kernel_sizes))

    p["fc_w1"] = nrm(keys[5], (cr, c_));  p["fc_b1"] = nrm(keys[6], (cr,), 0.02)
    p["fc_w2"] = nrm(keys[7], (cr, cr));  p["fc_b2"] = nrm(keys[8], (cr,), 0.02)
    p["fc_w3"] = nrm(keys[9], (K, cr));   p["fc_b3"] = nrm(keys[10], (K,), 0.02)

    p["w_mix"] = nrm(keys[11], (c2, c2))                # conv2d (out, in)
    p["gamma2"] = 1.0 - 0.1 * jnp.arange(c2, dtype=jnp.float32) / c2
    p["beta2"] = -0.02 * jnp.ones((c2,), jnp.float32)
    p["mean2"] = 0.005 * jnp.arange(c2, dtype=jnp.float32)
    p["var2"] = 1.0 + 0.3 * jnp.arange(c2, dtype=jnp.float32) / c2

    p["eca_w"] = 0.2 + 0.1 * jnp.arange(eca_k, dtype=jnp.float32)
    return p


if __name__ == "__main__":
    # c1=8, c2=16 -> c_=8, reduction=4 -> hidden=2, K=4, 16x16 spatial.
    # B=8 so the batched kernel runs with B_tile=4 and a 2-step parallel grid.
    B, C1, H, W = 8, 8, 16, 16
    C2 = 16
    kernel_sizes = [3, 5, 7, 3]
    eca_k = 5

    key = jax.random.PRNGKey(0)
    kx, kp = jax.random.split(key)
    x = jax.random.normal(kx, (B, C1, H, W), dtype=jnp.float32)
    params = init_params(kp, C1, C2, kernel_sizes, reduction=4, eca_k=eca_k)

    out = dynam_gsconv_forward(x, params, kernel_sizes=kernel_sizes,
                               eca_k=eca_k)
    out = jax.block_until_ready(out)
    assert out.shape == (B, C2, H, W), out.shape
    assert bool(jnp.all(jnp.isfinite(out)))

    ref = jax.block_until_ready(
        reference_forward(x, params, kernel_sizes=kernel_sizes, eca_k=eca_k))
    err = float(jnp.max(jnp.abs(out - ref)))
    scale = float(jnp.max(jnp.abs(ref))) + 1e-6
    assert err / scale < 2e-2, (err, scale)

    print("KERNEL_OK")
</pallas_src>

<mosaic_0001>
module attributes {stable_mosaic.version = 11 : i64} {
  func.func @_roll_probe_kernel(%arg0: memref<8x128xf32, #tpu.memory_space<vmem>>, %arg1: memref<8x128xf32, #tpu.memory_space<vmem>>) attributes {dimension_semantics = [], scalar_prefetch = 0 : i64, scratch_operands = 0 : i64, tpu.core_type = #tpu.core_type<tc>} {
    %c0 = arith.constant 0 : index
    %c0_0 = arith.constant 0 : index
    %0 = vector.load %arg0[%c0, %c0_0] : memref<8x128xf32, #tpu.memory_space<vmem>>, vector<8x128xf32>
    %c1_i32 = arith.constant 1 : i32
    %1 = tpu.dynamic_rotate %0 by %c1_i32 dim 1 : vector<8x128xf32>, i32 -> vector<8x128xf32>
    %c0_1 = arith.constant 0 : index
    %c0_2 = arith.constant 0 : index
    %2 = vector.load %arg1[%c0_1, %c0_2] : memref<8x128xf32, #tpu.memory_space<vmem>>, vector<8x128xf32>
    tpu.vector_store %arg1[%c0_1, %c0_2], %1 {strides = array<i32>} : memref<8x128xf32, #tpu.memory_space<vmem>>, vector<8x128xf32>,
    return
  }
}

</mosaic_0001>

<llo_original>
// kernel: tpu_custom_call.1
$region0: #{tpu_custom_call.1}
  #allocation0 [shape = 'u32[]', space=smem, size = 0x4, offset = 0x4, fixed_abs, tag = 'smem constant byte address 0x4 - core index']
  #allocation1 [shape = 'u32[144,128]{1,0:T(1,128)}', space=vmem, size = 0x12000, scoped, tag = 'internal scratch']
  %s0 = inlined_call_operand.hbm [shape: f32[8,128], index: 0, kind: input, shape index: {}]
  %s1 = inlined_call_operand.hbm [shape: f32[8,128], index: 1, kind: output, shape index: {}]
  %s2 = sld [smem:[#allocation0]]
  $region18: #{tpu_custom_call.1} parent=0
    _
  %s4 = ssub.s32 1, %s2
  %s5 = scalar_select 0, %s4, %s2
  $region1: #{tpu_custom_call.1} parent=0
    #allocation2 [shape = 'u8[4096]{0}', space=vmem, size = 0x1000, scoped, tag = 'input window, operand 0, single buffered']
    #allocation3 [shape = 's32[1]{0}', space=sflag, size = 0x4, scoped, tag = 'scoped memory for tpu_custom_call.1']
    #allocation4 [shape = 's32[1]{0}', space=sflag, size = 0x4, scoped, tag = 'scoped memory for tpu_custom_call.1']
    #allocation5 [shape = 'u8[4096]{0}', space=vmem, size = 0x1000, scoped, tag = 'output window, operand 0, single buffered']
    %6 = vsyncpa [#allocation3], 0
    %7 = vsyncpa [#allocation4], 0
    // Predicated region
    $region2: #{tpu_custom_call.1} parent=1 // pred_check
      _
    $region3: #{tpu_custom_call.1} parent=1 // pred_check_branch
      %9 = sbr.rel (0) target = $region5
    $region4: #{tpu_custom_call.1} parent=1 // pred_region
      %s11 = ssub.s32 128, 128
      %12 = vsyncadd [#allocation3], %s11
      %s14 = sshll.u32 [#allocation2], 4
      %s15 = int_to_ptr.vmem [resolvable:$true] %s14
      %17 = dma.hbm_to_vmem [thread:$0]  %s0, 128, %s15, [#allocation3]
    $region5: #{tpu_custom_call.1} parent=1 // pred_fallthru
      _
    // Predicated region
    $region6: #{tpu_custom_call.1} parent=1 // pred_check
      _
    $region7: #{tpu_custom_call.1} parent=1 // pred_check_branch
      %19 = sbr.rel (0) target = $region9
    $region8: #{tpu_custom_call.1} parent=1 // pred_region
      %20 = dma.done [#allocation3], 128
    $region9: #{tpu_custom_call.1} parent=1 // pred_fallthru
      _
    %v21 = vld [vmem:[#allocation2] sm:$0xff]
    %22 = vrot.lane.b32.xlu0 %v21, 1
    %v23 = vpop.permute.xlu0 %22
    %24 = vst [vmem:[#allocation5] sm:$0xff] %v23
    // Predicated region
    $region10: #{tpu_custom_call.1} parent=1 // pred_check
      _
    $region11: #{tpu_custom_call.1} parent=1 // pred_check_branch
      %26 = sbr.rel (0) target = $region13
    $region12: #{tpu_custom_call.1} parent=1 // pred_region
      %s28 = ssub.s32 128, 128
      %29 = vsyncadd [#allocation4], %s28
      %s31 = sshll.u32 [#allocation5], 4
      %s32 = int_to_ptr.vmem [resolvable:$true] %s31
      %34 = dma.vmem_to_hbm [thread:$0]  %s32, 128, %s1, [#allocation4]
    $region13: #{tpu_custom_call.1} parent=1 // pred_fallthru
      _
    // Predicated region
    $region14: #{tpu_custom_call.1} parent=1 // pred_check
      _
    $region15: #{tpu_custom_call.1} parent=1 // pred_check_branch
      %36 = sbr.rel (0) target = $region17
    $region16: #{tpu_custom_call.1} parent=1 // pred_region
      %37 = dma.done [#allocation4], 128
    $region17: #{tpu_custom_call.1} parent=1 // pred_fallthru
      _
    %38 = vsyncpa [#allocation3], 1
    %39 = vsyncpa [#allocation4], 1

</llo_original>
